<compile_context>
chip_gen: v7x
topology: tpu7x:2x2x1
jax: 0.10.0
libtpu: 0.0.40
codegen_flags: <defaults>
</compile_context>

<pallas_src>
import functools

import jax
import jax.numpy as jnp
from jax import lax
from jax.experimental import pallas as pl
from jax.experimental.pallas import tpu as pltpu

EPS = 1e-5
_FUSED_BYTES_LIMIT = 4 * 1024 * 1024      # single-pass path if f32 view <= this


def _tpu_budgets():
    """(block_budget_bytes, vmem_limit_bytes) tuned per TPU generation."""
    try:
        vmem = pltpu.get_tpu_info().vmem_capacity_bytes
    except Exception:
        vmem = 64 * 1024 * 1024            # conservative default (v7x-sized VMEM)
    if vmem >= 96 * 1024 * 1024:           # v5e / v6e: 128 MiB physical VMEM
        return 4 * 1024 * 1024, 64 * 1024 * 1024
    return 2 * 1024 * 1024, 32 * 1024 * 1024   # v7x: 64 MiB physical VMEM


def _choose_tiles(N, C2, HWp, block_budget):
    """tile_l: largest multiple-of-128 divisor of HWp whose (C2, tile_l) f32 row
    fits the budget; tile_n: largest divisor of N keeping the block on budget."""
    n128 = HWp // 128
    d_best = 1
    for d in range(1, n128 + 1):
        if n128 % d == 0 and C2 * (128 * d) * 4 <= block_budget:
            d_best = d
    tile_l = 128 * d_best
    tile_n = 1
    for d in range(1, N + 1):
        if N % d == 0 and d * C2 * tile_l * 4 <= block_budget:
            tile_n = d
    return tile_n, tile_l


def _make_fused_kernel(inv_nhw):
    """Single pass: stats + normalize with the whole activation resident in VMEM."""
    def kernel(x_ref, w_ref, b_ref, o_ref):
        x = x_ref[...]                                          # (N, C2, HWp)
        s = jnp.sum(jnp.sum(x, axis=2, keepdims=True), axis=0, keepdims=True)
        q = jnp.sum(jnp.sum(x * x, axis=2, keepdims=True), axis=0, keepdims=True)
        mean = s * inv_nhw                                      # (1, C2, 1)
        var = jnp.maximum(q * inv_nhw - mean * mean, 0.0)       # guard cancellation
        scale = w_ref[...][None] * lax.rsqrt(var + EPS)
        shift = b_ref[...][None] - mean * scale
        o_ref[...] = x * scale + shift
    return kernel


def _stats_kernel(x_ref, psum_ref, pssq_ref):
    """Pass 1: per-(N-tile, channel) partial sum / sum-of-squares.  The
    (1, C2, 1) output block stays resident across the lane grid axis and is
    used directly as the accumulator (no VMEM scratch)."""
    @pl.when(pl.program_id(1) == 0)
    def _init():
        psum_ref[...] = jnp.zeros_like(psum_ref)
        pssq_ref[...] = jnp.zeros_like(pssq_ref)

    x = x_ref[...]                                              # (tile_n, C2, tile_l)
    psum_ref[...] += jnp.sum(jnp.sum(x, axis=2, keepdims=True),
                             axis=0, keepdims=True)
    pssq_ref[...] += jnp.sum(jnp.sum(x * x, axis=2, keepdims=True),
                             axis=0, keepdims=True)


def _apply_kernel(x_ref, scale_ref, shift_ref, o_ref):
    """Pass 2: out = x * scale + shift (one multiply-add per element)."""
    o_ref[...] = x_ref[...] * scale_ref[...][None] + shift_ref[...][None]


@functools.partial(jax.jit,
                   static_argnames=("fused_bytes_limit", "block_budget_bytes"))
def naive_complex_batchnorm2d(x, w_real, b_real, w_imag, b_imag,
                              fused_bytes_limit=None, block_budget_bytes=None):
    """x: (N, C, H, W) complex64 -> (N, C, H, W) complex64 (training-mode BN)."""
    N, C, H, W = x.shape
    HW = H * W
    C2 = 2 * C
    inv_nhw = 1.0 / float(N * HW)

    block_budget, vmem_limit = _tpu_budgets()
    if block_budget_bytes is not None:
        block_budget = block_budget_bytes
    if fused_bytes_limit is None:
        fused_bytes_limit = _FUSED_BYTES_LIMIT

    # Real BN over 2C channels == complex BN over C channels: concatenate the
    # real / imag planes on the channel axis (one fused HBM sweep under jit).
    xv = jnp.concatenate([jnp.real(x), jnp.imag(x)],
                         axis=1).astype(jnp.float32).reshape(N, C2, HW)
    w = jnp.concatenate([w_real, w_imag]).astype(jnp.float32).reshape(C2, 1)
    b = jnp.concatenate([b_real, b_imag]).astype(jnp.float32).reshape(C2, 1)

    # Zero-pad the lane axis to a multiple of 128: keeps every block (8,128)-
    # legal and stores lane-dense; harmless for stats since inv_nhw uses the
    # true N*H*W (zeros contribute nothing to sum / sum-of-squares).
    HWp = ((HW + 127) // 128) * 128
    if HWp != HW:
        xv = jnp.pad(xv, ((0, 0), (0, 0), (0, HWp - HW)))

    view_bytes = N * C2 * HWp * 4

    if view_bytes <= fused_bytes_limit:
        # Single fused pass: x is read from HBM exactly once.
        yv = pl.pallas_call(
            _make_fused_kernel(inv_nhw),
            out_shape=jax.ShapeDtypeStruct((N, C2, HWp), jnp.float32),
            compiler_params=pltpu.CompilerParams(
                vmem_limit_bytes=32 * 1024 * 1024),
        )(xv, w, b)
    else:
        tile_n, tile_l = _choose_tiles(N, C2, HWp, block_budget)
        grid = (N // tile_n, HWp // tile_l)
        x_spec = pl.BlockSpec((tile_n, C2, tile_l), lambda ni, li: (ni, 0, li))
        p_spec = pl.BlockSpec((C2, 1), lambda ni, li: (0, 0))
        acc_spec = pl.BlockSpec((1, C2, 1), lambda ni, li: (ni, 0, 0))

        # Pass 1: per-N-tile partial sums; N-tile axis is "parallel" so both
        # TensorCores work on the reduction on v7x.
        psum, pssq = pl.pallas_call(
            _stats_kernel,
            grid=grid,
            in_specs=[x_spec],
            out_specs=(acc_spec, acc_spec),
            out_shape=(jax.ShapeDtypeStruct((grid[0], C2, 1), jnp.float32),) * 2,
            compiler_params=pltpu.CompilerParams(
                dimension_semantics=("parallel", "arbitrary"),
                vmem_limit_bytes=vmem_limit),
        )(xv)

        # Tiny per-channel fold (2C scalars) in plain JAX.
        mean = jnp.sum(psum, axis=0) * inv_nhw                       # (C2, 1)
        var = jnp.maximum(jnp.sum(pssq, axis=0) * inv_nhw - mean * mean, 0.0)
        scale = w * lax.rsqrt(var + EPS)
        shift = b - mean * scale

        # Pass 2: elementwise scale/shift, fully parallel over both tile axes.
        yv = pl.pallas_call(
            _apply_kernel,
            grid=grid,
            in_specs=[x_spec, p_spec, p_spec],
            out_specs=x_spec,
            out_shape=jax.ShapeDtypeStruct((N, C2, HWp), jnp.float32),
            compiler_params=pltpu.CompilerParams(
                dimension_semantics=("parallel", "parallel"),
                vmem_limit_bytes=vmem_limit),
        )(xv, scale, shift)

    y = yv[:, :, :HW].reshape(N, C2, H, W)
    return lax.complex(y[:, :C], y[:, C:])


def _reference(x, w_real, b_real, w_imag, b_imag):
    """Pure-JAX reference mirroring torch BatchNorm2d training-mode forward."""
    def bn(v, w, b):
        mean = v.mean(axis=(0, 2, 3), keepdims=True)
        var = v.var(axis=(0, 2, 3), keepdims=True)     # biased variance
        return ((v - mean) / jnp.sqrt(var + EPS)
                * w.reshape(1, -1, 1, 1) + b.reshape(1, -1, 1, 1))

    r = bn(jnp.real(x).astype(jnp.float32), w_real, b_real)
    i = bn(jnp.imag(x).astype(jnp.float32), w_imag, b_imag)
    return lax.complex(r, i)


if __name__ == "__main__":
    key = jax.random.PRNGKey(0)
    kxr, kxi, kwr, kbr, kwi, kbi = jax.random.split(key, 6)

    # Primary (module-sized) case: small activation -> fused single-pass path.
    N, C, H, W = 2, 4, 16, 16
    x = lax.complex(jax.random.normal(kxr, (N, C, H, W), jnp.float32),
                    jax.random.normal(kxi, (N, C, H, W), jnp.float32))
    w_real = jax.random.normal(kwr, (C,), jnp.float32) * 0.1 + 1.0
    b_real = jax.random.normal(kbr, (C,), jnp.float32) * 0.1
    w_imag = jax.random.normal(kwi, (C,), jnp.float32) * 0.1 + 1.0
    b_imag = jax.random.normal(kbi, (C,), jnp.float32) * 0.1

    out = jax.block_until_ready(
        naive_complex_batchnorm2d(x, w_real, b_real, w_imag, b_imag))
    ref = _reference(x, w_real, b_real, w_imag, b_imag)
    assert out.shape == (N, C, H, W) and out.dtype == jnp.complex64
    assert jnp.allclose(jnp.real(out), jnp.real(ref), atol=1e-4, rtol=1e-4)
    assert jnp.allclose(jnp.imag(out), jnp.imag(ref), atol=1e-4, rtol=1e-4)

    # Secondary check: force the tiled streaming path (multi-step grid, padded
    # ragged HW, C2 not a multiple of 8) on a still-small problem.
    N2, Cc, H2, W2 = 4, 3, 30, 30               # HW=900 -> padded to 1024
    x2 = lax.complex(jax.random.normal(kxr, (N2, Cc, H2, W2), jnp.float32),
                     jax.random.normal(kxi, (N2, Cc, H2, W2), jnp.float32))
    w2r = jax.random.normal(kwr, (Cc,), jnp.float32) * 0.1 + 1.0
    b2r = jax.random.normal(kbr, (Cc,), jnp.float32) * 0.1
    w2i = jax.random.normal(kwi, (Cc,), jnp.float32) * 0.1 + 1.0
    b2i = jax.random.normal(kbi, (Cc,), jnp.float32) * 0.1
    out2 = jax.block_until_ready(
        naive_complex_batchnorm2d(x2, w2r, b2r, w2i, b2i,
                                  fused_bytes_limit=0,
                                  block_budget_bytes=16 * 1024))
    ref2 = _reference(x2, w2r, b2r, w2i, b2i)
    assert jnp.allclose(jnp.real(out2), jnp.real(ref2), atol=1e-4, rtol=1e-4)
    assert jnp.allclose(jnp.imag(out2), jnp.imag(ref2), atol=1e-4, rtol=1e-4)

    print("KERNEL_OK")
</pallas_src>

<mosaic_0001>
module attributes {stable_mosaic.version = 11 : i64} {
  func.func @kernel(%arg0: memref<2x8x256xf32, #tpu.memory_space<vmem>>, %arg1: memref<8x1xf32, #tpu.memory_space<vmem>>, %arg2: memref<8x1xf32, #tpu.memory_space<vmem>>, %arg3: memref<2x8x256xf32, #tpu.memory_space<vmem>>) attributes {dimension_semantics = [], scalar_prefetch = 0 : i64, scratch_operands = 0 : i64, tpu.core_type = #tpu.core_type<tc>} {
    %c0 = arith.constant 0 : index
    %c0_0 = arith.constant 0 : index
    %c0_1 = arith.constant 0 : index
    %0 = vector.load %arg0[%c0, %c0_0, %c0_1] : memref<2x8x256xf32, #tpu.memory_space<vmem>>, vector<2x8x256xf32>
    %cst = arith.constant dense<0.000000e+00> : vector<2x8xf32>
    %1 = vector.multi_reduction <add>, %0, %cst [2] : vector<2x8x256xf32> to vector<2x8xf32>
    %2 = vector.shape_cast %1 : vector<2x8xf32> to vector<2x8x1xf32>
    %cst_2 = arith.constant dense<0.000000e+00> : vector<8x1xf32>
    %3 = vector.multi_reduction <add>, %2, %cst_2 [0] : vector<2x8x1xf32> to vector<8x1xf32>
    %4 = vector.shape_cast %3 : vector<8x1xf32> to vector<1x8x1xf32>
    %5 = arith.mulf %0, %0 : vector<2x8x256xf32>
    %cst_3 = arith.constant dense<0.000000e+00> : vector<2x8xf32>
    %6 = vector.multi_reduction <add>, %5, %cst_3 [2] : vector<2x8x256xf32> to vector<2x8xf32>
    %7 = vector.shape_cast %6 : vector<2x8xf32> to vector<2x8x1xf32>
    %cst_4 = arith.constant dense<0.000000e+00> : vector<8x1xf32>
    %8 = vector.multi_reduction <add>, %7, %cst_4 [0] : vector<2x8x1xf32> to vector<8x1xf32>
    %9 = vector.shape_cast %8 : vector<8x1xf32> to vector<1x8x1xf32>
    %cst_5 = arith.constant 0.001953125 : f32
    %10 = vector.broadcast %cst_5 : f32 to vector<1x8x1xf32>
    %11 = arith.mulf %4, %10 : vector<1x8x1xf32>
    %cst_6 = arith.constant 0.001953125 : f32
    %12 = vector.broadcast %cst_6 : f32 to vector<1x8x1xf32>
    %13 = arith.mulf %9, %12 : vector<1x8x1xf32>
    %14 = arith.mulf %11, %11 : vector<1x8x1xf32>
    %15 = arith.subf %13, %14 : vector<1x8x1xf32>
    %cst_7 = arith.constant 0.000000e+00 : f32
    %16 = vector.broadcast %cst_7 : f32 to vector<1x8x1xf32>
    %17 = arith.maximumf %15, %16 : vector<1x8x1xf32>
    %c0_8 = arith.constant 0 : index
    %c0_9 = arith.constant 0 : index
    %18 = vector.load %arg1[%c0_8, %c0_9] : memref<8x1xf32, #tpu.memory_space<vmem>>, vector<8x1xf32>
    %19 = vector.shape_cast %18 : vector<8x1xf32> to vector<1x8x1xf32>
    %cst_10 = arith.constant 9.99999974E-6 : f32
    %20 = vector.broadcast %cst_10 : f32 to vector<1x8x1xf32>
    %21 = arith.addf %17, %20 : vector<1x8x1xf32>
    %22 = math.rsqrt %21 : vector<1x8x1xf32>
    %23 = arith.mulf %19, %22 : vector<1x8x1xf32>
    %c0_11 = arith.constant 0 : index
    %c0_12 = arith.constant 0 : index
    %24 = vector.load %arg2[%c0_11, %c0_12] : memref<8x1xf32, #tpu.memory_space<vmem>>, vector<8x1xf32>
    %25 = vector.shape_cast %24 : vector<8x1xf32> to vector<1x8x1xf32>
    %26 = arith.mulf %11, %23 : vector<1x8x1xf32>
    %27 = arith.subf %25, %26 : vector<1x8x1xf32>
    %28 = vector.broadcast %23 : vector<1x8x1xf32> to vector<2x8x256xf32>
    %29 = arith.mulf %0, %28 : vector<2x8x256xf32>
    %30 = vector.broadcast %27 : vector<1x8x1xf32> to vector<2x8x256xf32>
    %31 = arith.addf %29, %30 : vector<2x8x256xf32>
    %c0_13 = arith.constant 0 : index
    %c0_14 = arith.constant 0 : index
    %c0_15 = arith.constant 0 : index
    %32 = vector.load %arg3[%c0_13, %c0_14, %c0_15] : memref<2x8x256xf32, #tpu.memory_space<vmem>>, vector<2x8x256xf32>
    tpu.vector_store %arg3[%c0_13, %c0_14, %c0_15], %31 {strides = array<i32>} : memref<2x8x256xf32, #tpu.memory_space<vmem>>, vector<2x8x256xf32>,
    return
  }
}

</mosaic_0001>

<llo_original>
// kernel: custom-call
$region0: #{custom-call}
  %s0 = inlined_call_operand.hbm [shape: c64[2,4,16,16], index: 0, kind: input, shape index: {}]
  %s1 = inlined_call_operand.vmem [shape: f32[2,4,16,16], index: 1, kind: output, shape index: {}]
  $region1: #{custom-call} parent=0
    #allocation0 [shape = 's32[1]{0}', space=sflag, size = 0x4, scoped, tag = 'scoped memory for custom-call']
    %2 = vsyncpa [#allocation0], 0
    %s3 = sshll.u32 %s1, 4
    %s4 = int_to_ptr.vmem [resolvable:$true] %s3
    %6 = dma.hbm_to_vmem [thread:$0]  %s0, 2048, %s4, [#allocation0]
    %7 = dma.done [#allocation0], 2048
    %8 = vsyncpa [#allocation0], 1

// kernel: custom-call.1
$region0: #{custom-call.1}
  %s0 = inlined_call_operand.hbm [shape: c64[2,4,16,16], index: 0, kind: input, shape index: {}]
  %s1 = inlined_call_operand.vmem [shape: f32[2,4,16,16], index: 1, kind: output, shape index: {}]
  %s2 = scalar_lea.hbm %s0, 2048
  $region1: #{custom-call.1} parent=0
    #allocation0 [shape = 's32[1]{0}', space=sflag, size = 0x4, scoped, tag = 'scoped memory for custom-call.1']
    %3 = vsyncpa [#allocation0], 0
    %s4 = sshll.u32 %s1, 4
    %s5 = int_to_ptr.vmem [resolvable:$true] %s4
    %7 = dma.hbm_to_vmem [thread:$0]  %s2, 2048, %s5, [#allocation0]
    %8 = dma.done [#allocation0], 2048
    %9 = vsyncpa [#allocation0], 1

// kernel: custom-call.2
$region0: #{custom-call.2}
  %s0 = inlined_call_operand.vmem [shape: f32[2,4,16,16], index: 0, kind: input, shape index: {}]
  %s1 = inlined_call_operand.vmem [shape: f32[2,4,16,16], index: 1, kind: input, shape index: {}]
  %s2 = inlined_call_operand.hbm [shape: c64[2,4,16,16], index: 2, kind: output, shape index: {}]
  %s3 = scalar_lea.hbm %s2, 2048
  $region1: #{custom-call.2} parent=0
    #allocation0 [shape = 's32[1]{0}', space=sflag, size = 0x4, scoped, tag = 'scoped memory for custom-call.2']
    %4 = vsyncpa [#allocation0], 0
    %s5 = sshll.u32 %s0, 4
    %s6 = int_to_ptr.vmem [resolvable:$true] %s5
    %8 = dma.vmem_to_hbm [thread:$0]  %s6, 2048, %s2, [#allocation0]
    %9 = dma.done [#allocation0], 2048
    %10 = vsyncpa [#allocation0], 1
  $region2: #{custom-call.2} parent=0
    #allocation1 [shape = 's32[1]{0}', space=sflag, size = 0x4, scoped, tag = 'scoped memory for custom-call.2']
    %11 = vsyncpa [#allocation1], 0
    %s12 = sshll.u32 %s1, 4
    %s13 = int_to_ptr.vmem [resolvable:$true] %s12
    %15 = dma.vmem_to_hbm [thread:$0]  %s13, 2048, %s3, [#allocation1]
    %16 = dma.done [#allocation1], 2048
    %17 = vsyncpa [#allocation1], 1

// kernel: naive_complex_batchnorm2d.1
$region0: #{naive_complex_batchnorm2d.1}
  #allocation0 [shape = 'u32[]', space=smem, size = 0x4, offset = 0x4, fixed_abs, tag = 'smem constant byte address 0x4 - core index']
  #allocation1 [shape = 'u32[144,128]{1,0:T(1,128)}', space=vmem, size = 0x12000, scoped, tag = 'internal scratch']
  %s0 = inlined_call_operand.vmem [shape: f32[2,8,256], index: 0, kind: input, shape index: {}]
  %s1 = inlined_call_operand.vmem [shape: f32[8,1], index: 1, kind: input, shape index: {}]
  %s2 = inlined_call_operand.vmem [shape: f32[8,1], index: 2, kind: input, shape index: {}]
  %s3 = inlined_call_operand.vmem [shape: f32[2,8,256], index: 3, kind: output, shape index: {}]
  %s4 = sld [smem:[#allocation0]]
  $region22: #{naive_complex_batchnorm2d.1} parent=0
    _
  %s6 = ssub.s32 1, %s4
  %s7 = scalar_select 0, %s6, %s4
  // Predicated region
  $region2: #{naive_complex_batchnorm2d.1} parent=0 // pred_check
    _
  $region3: #{naive_complex_batchnorm2d.1} parent=0 // pred_check_branch
    %9 = sbr.rel (0) target = $region5
  $region4: #{naive_complex_batchnorm2d.1} parent=0 // pred_region
    _
  $region5: #{naive_complex_batchnorm2d.1} parent=0 // pred_fallthru
    _
  // Predicated region
  $region6: #{naive_complex_batchnorm2d.1} parent=0 // pred_check
    _
  $region7: #{naive_complex_batchnorm2d.1} parent=0 // pred_check_branch
    %11 = sbr.rel (0) target = $region9
  $region8: #{naive_complex_batchnorm2d.1} parent=0 // pred_region
    _
  $region9: #{naive_complex_batchnorm2d.1} parent=0 // pred_fallthru
    _
  // Predicated region
  $region10: #{naive_complex_batchnorm2d.1} parent=0 // pred_check
    _
  $region11: #{naive_complex_batchnorm2d.1} parent=0 // pred_check_branch
    %13 = sbr.rel (0) target = $region13
  $region12: #{naive_complex_batchnorm2d.1} parent=0 // pred_region
    _
  $region13: #{naive_complex_batchnorm2d.1} parent=0 // pred_fallthru
    _
  %v14 = vld [vmem:[%s0] sm:$0xff]
  %v15 = vld [vmem:[%s0 + $0x8] sm:$0xff]
  %v16 = vld [vmem:[%s0 + $0x10] sm:$0xff]
  %v17 = vld [vmem:[%s0 + $0x18] sm:$0xff]
  %v18 = vadd.f32 %v14, %v15
  %19 = vadd.xlane.f32.xlu0 %v18
  %v20 = vpop.xlane.xlu0 %19
  %v21 = vadd.f32 %v16, %v17
  %22 = vadd.xlane.f32.xlu0 %v21
  %v23 = vpop.xlane.xlu0 %22
  %v24 = vadd.f32 %v20, %v23
  %v25 = vmul.f32 %v14, %v14
  %v26 = vmul.f32 %v15, %v15
  %v27 = vmul.f32 %v16, %v16
  %v28 = vmul.f32 %v17, %v17
  %v29 = vadd.f32 %v25, %v26
  %30 = vadd.xlane.f32.xlu0 %v29
  %v31 = vpop.xlane.xlu0 %30
  %v32 = vadd.f32 %v27, %v28
  %33 = vadd.xlane.f32.xlu0 %v32
  %v34 = vpop.xlane.xlu0 %33
  %v35 = vadd.f32 %v31, %v34
  %v36 = vmul.f32 %v24, 0.001953125
  %v37 = vmul.f32 %v35, 0.001953125
  %v38 = vmul.f32 %v36, %v36
  %v39 = vsub.f32 %v37, %v38
  %v40 = vmax.f32 %v39, 0.0
  %v41 = vld [vmem:[%s1] sm:$0xff]
  %v42 = vadd.f32 %v40, 1e-05
  %v43 = vrsqrt.pop %v42
  %v44 = vmul.f32 %v41, %v43
  %v45 = vld [vmem:[%s2] sm:$0xff]
  %v46 = vmul.f32 %v36, %v44
  %v47 = vsub.f32 %v45, %v46
  %49 = vset.pattern.permute.xlu0 0
  %50 = vperm.xlu0 %49, %v44
  %v51 = vpop.permute.xlu0 %50
  %v53 = vmul.f32 %v14, %v51
  %v54 = vmul.f32 %v15, %v51
  %v55 = vmul.f32 %v16, %v51
  %v56 = vmul.f32 %v17, %v51
  %58 = vset.pattern.permute.xlu0 0
  %59 = vperm.xlu0 %58, %v47
  %v60 = vpop.permute.xlu0 %59
  %v62 = vadd.f32 %v53, %v60
  %v63 = vadd.f32 %v54, %v60
  %v64 = vadd.f32 %v55, %v60
  %v65 = vadd.f32 %v56, %v60
  %66 = vst [vmem:[%s3] sm:$0xff] %v62
  %67 = vst [vmem:[%s3 + $0x8] sm:$0xff] %v63
  %68 = vst [vmem:[%s3 + $0x10] sm:$0xff] %v64
  %69 = vst [vmem:[%s3 + $0x18] sm:$0xff] %v65
  // Predicated region
  $region14: #{naive_complex_batchnorm2d.1} parent=0 // pred_check
    _
  $region15: #{naive_complex_batchnorm2d.1} parent=0 // pred_check_branch
    %71 = sbr.rel (0) target = $region17
  $region16: #{naive_complex_batchnorm2d.1} parent=0 // pred_region
    _
  $region17: #{naive_complex_batchnorm2d.1} parent=0 // pred_fallthru
    _
  // Predicated region
  $region18: #{naive_complex_batchnorm2d.1} parent=0 // pred_check
    _
  $region19: #{naive_complex_batchnorm2d.1} parent=0 // pred_check_branch
    %73 = sbr.rel (0) target = $region21
  $region20: #{naive_complex_batchnorm2d.1} parent=0 // pred_region
    _
  $region21: #{naive_complex_batchnorm2d.1} parent=0 // pred_fallthru
    _

</llo_original>
